<compile_context>
chip_gen: v7x
topology: tpu7x:2x2x1
jax: 0.10.0
libtpu: 0.0.40
codegen_flags: <defaults>
</compile_context>

<pallas_src>
import jax
import jax.numpy as jnp
from jax.experimental import pallas as pl
from jax.experimental.pallas import tpu as pltpu

KERNEL_SIZES = (2, 3, 4)
KERNEL_NUM = len(KERNEL_SIZES)   # matches `kernel_num = len(kernel_sizes)` in the reference
NUM_LABELS = 4                   # labels_5 has 4 entries

_LANE = 128
_SUBLANE = 8


def _round_up(x, m):
    return ((x + m - 1) // m) * m


def kimcnn_kernel(xi_ref, wall_ref, bconv_ref, mask_ref, wc_ref, bc_ref, out_ref):
    """Fused KimCNN forward for one TB-row batch tile (im2col formulation).

    xi_ref   : (TB, L, KD)  bf16  im2col'd embedded tokens (KD = KMAX * D)
    wall_ref : (KD, CG)     bf16  fused conv weights (unused taps zeroed per group)
    bconv_ref: (1, CG)      f32   fused conv bias (padded channel groups)
    mask_ref : (L, CG)      f32   1.0 where position t is a valid conv output
    wc_ref   : (CG, NLP)    bf16  zero-padded classifier weight
    bc_ref   : (1, NLP)     f32   zero-padded classifier bias
    out_ref  : (TB, NLP)    f32   lane-dense padded logits
    """
    tb, seq, kd = xi_ref.shape
    cg = wall_ref.shape[-1]

    # One well-shaped MXU matmul produces the conv output for every kernel size.
    x2 = xi_ref[...].reshape(tb * seq, kd)                        # bf16 [TB*L, KD]
    s = jnp.dot(x2, wall_ref[...], preferred_element_type=jnp.float32)
    s = s.reshape(tb, seq, cg)

    s = jnp.maximum(s + bconv_ref[...][None, :, :], 0.0)          # bias + relu (f32)
    # Mask AFTER relu: outputs are >= 0, so zeroed invalid positions (partial
    # convs past the sequence end) can never win the time max.
    s = s * mask_ref[...][None, :, :]
    feat = jnp.max(s, axis=1)                                     # max-pool over time -> [TB, CG]

    # TODO(synk): dropout (p=0.5) is identity at inference; training-mode RNG dropout not implemented.
    out_ref[...] = (jnp.dot(feat.astype(jnp.bfloat16), wc_ref[...],
                            preferred_element_type=jnp.float32)
                    + bc_ref[...])


def _vmem_limit_bytes():
    """Generation-aware VMEM limit (v7x: 64 MiB/core; v5e/v6e: 128 MiB)."""
    cap = 64 * 1024 * 1024
    try:
        info = pltpu.get_tpu_info()
        cap = int(getattr(info, "vmem_capacity_bytes", cap))
    except Exception:
        pass
    # Use at most ~half of physical VMEM, never below 32 MiB or above 96 MiB.
    return int(min(max(cap // 2, 32 * 1024 * 1024), 96 * 1024 * 1024))


def _choose_batch_tile(batch, seq, kd, cg, nlp, vmem_limit):
    """Pick TB (multiple of 8) so the double-buffered pipeline + temps fit in VMEM."""
    budget = (vmem_limit * 3) // 4
    resident = 2 * (kd * cg * 2            # fused conv weights (bf16, buffered window)
                    + cg * nlp * 2         # classifier weight (bf16)
                    + seq * cg * 4         # validity mask
                    + cg * 4 + nlp * 4)    # biases
    per_sample = (2 * seq * kd * 2         # x block, double buffered, bf16
                  + 3 * seq * cg * 4       # matmul output + bias/relu/mask temporaries (f32)
                  + cg * 4                 # pooled features
                  + 2 * nlp * 4)           # out block, double buffered
    avail = max(budget - resident, per_sample * _SUBLANE)
    tb = max(_SUBLANE, min(512, avail // per_sample))
    tb = (tb // _SUBLANE) * _SUBLANE
    ideal = max(_SUBLANE, _round_up(batch, _SUBLANE))
    if ideal >= 2 * _SUBLANE:
        # Keep at least 2 batch tiles so both v7x TensorCores get work.
        tb = min(tb, max(_SUBLANE, _round_up((batch + 1) // 2, _SUBLANE)))
    tb = min(tb, ideal)
    return int(tb)


def kimcnn_forward(ids, embed_table, conv_ws, conv_bs, wc, bc,
                   kernel_sizes=KERNEL_SIZES):
    """ids: [B, L] int32; returns logits [B, num_labels] f32."""
    batch, seq = ids.shape
    d = embed_table.shape[1]
    c = conv_ws[0].shape[-1]
    g = len(kernel_sizes)
    kmax = max(kernel_sizes)
    num_labels = wc.shape[1]
    f = g * c
    kd = kmax * d                        # im2col contraction width
    cg = _round_up(f, _LANE)             # fused conv channels padded to lane width
    nlp = _round_up(num_labels, _LANE)   # lane-dense logits width

    # ---- host-side weight repacking (tiny; pure layout) ----
    wall = jnp.zeros((kd, cg), jnp.float32)
    bconv = jnp.zeros((1, cg), jnp.float32)
    mask = jnp.zeros((seq, cg), jnp.float32)
    for gi, k in enumerate(kernel_sizes):
        lo = gi * c
        for i in range(k):
            wall = wall.at[i * d:(i + 1) * d, lo:lo + c].set(conv_ws[gi][i])
        bconv = bconv.at[0, lo:lo + c].set(conv_bs[gi])
        mask = mask.at[:seq - k + 1, lo:lo + c].set(1.0)
    wall = wall.astype(jnp.bfloat16)
    wc_pad = (jnp.zeros((cg, nlp), jnp.float32)
              .at[:f, :num_labels].set(wc).astype(jnp.bfloat16))
    bc_pad = jnp.zeros((1, nlp), jnp.float32).at[0, :num_labels].set(bc)

    # ---- embedding gather + im2col stay in XLA; activations hit HBM as bf16 ----
    # TODO(synk): fuse the embedding gather into the kernel (scalar-prefetch ids +
    # per-row DMA) to avoid materializing [B, L, KMAX*D] in HBM.
    x = jnp.take(embed_table.astype(jnp.bfloat16), ids, axis=0)    # [B, L, D] bf16
    cols = [x]
    for i in range(1, kmax):
        cols.append(jnp.concatenate(
            [x[:, i:, :], jnp.zeros((batch, i, d), x.dtype)], axis=1))
    xi = jnp.concatenate(cols, axis=-1)                             # [B, L, KD] bf16

    vmem_limit = _vmem_limit_bytes()
    tb = _choose_batch_tile(batch, seq, kd, cg, nlp, vmem_limit)
    b_pad = _round_up(batch, tb)
    if b_pad != batch:
        xi = jnp.concatenate(
            [xi, jnp.zeros((b_pad - batch, seq, kd), xi.dtype)], axis=0)
    num_tiles = b_pad // tb

    out = pl.pallas_call(
        kimcnn_kernel,
        out_shape=jax.ShapeDtypeStruct((b_pad, nlp), jnp.float32),
        grid=(num_tiles,),
        in_specs=[
            pl.BlockSpec((tb, seq, kd), lambda b: (b, 0, 0)),
            pl.BlockSpec((kd, cg), lambda b: (0, 0)),
            pl.BlockSpec((1, cg), lambda b: (0, 0)),
            pl.BlockSpec((seq, cg), lambda b: (0, 0)),
            pl.BlockSpec((cg, nlp), lambda b: (0, 0)),
            pl.BlockSpec((1, nlp), lambda b: (0, 0)),
        ],
        out_specs=pl.BlockSpec((tb, nlp), lambda b: (b, 0)),
        compiler_params=pltpu.CompilerParams(
            dimension_semantics=("parallel",),
            vmem_limit_bytes=vmem_limit,
        ),
    )(xi, wall, bconv, mask, wc_pad, bc_pad)
    return out[:batch, :num_labels]


def reference_forward(ids, embed_table, conv_ws, conv_bs, wc, bc):
    """Pure-JAX f32 reference mirroring the PyTorch forward (eval mode)."""
    x = jnp.take(embed_table, ids, axis=0).astype(jnp.float32)     # [B, L, D]
    feats = []
    for ki, k in enumerate(KERNEL_SIZES):
        w = conv_ws[ki]                                            # [k, D, C]
        l_out = x.shape[1] - k + 1
        s = jnp.zeros((x.shape[0], l_out, w.shape[-1]), jnp.float32)
        for i in range(k):
            s = s + jnp.einsum("bld,dc->blc", x[:, i:i + l_out, :], w[i])
        s = jnp.maximum(s + conv_bs[ki][None, None, :], 0.0)
        feats.append(jnp.max(s, axis=1))                           # [B, C]
    feat = jnp.concatenate(feats, axis=1)                          # [B, F]
    return feat @ wc + bc[None, :]


if __name__ == "__main__":
    # Small shapes consistent with the module's forward.
    B = 2          # batch
    L = 16         # seq_len
    D = 32         # embed_dim
    VOCAB = 16     # embed_num (== seq_len in the reference config)
    C = KERNEL_NUM
    F = len(KERNEL_SIZES) * C

    key = jax.random.PRNGKey(0)
    k_emb, k_ids, k_w2, k_w3, k_w4, k_cb, k_wc, k_bc = jax.random.split(key, 8)

    embed_table = (0.1 * jax.random.normal(k_emb, (VOCAB, D))).astype(jnp.float32)
    ids = jax.random.randint(k_ids, (B, L), 0, VOCAB, dtype=jnp.int32)

    conv_ws = [
        (0.1 * jax.random.normal(k_w2, (KERNEL_SIZES[0], D, C))).astype(jnp.float32),
        (0.1 * jax.random.normal(k_w3, (KERNEL_SIZES[1], D, C))).astype(jnp.float32),
        (0.1 * jax.random.normal(k_w4, (KERNEL_SIZES[2], D, C))).astype(jnp.float32),
    ]
    conv_bs = (0.1 * jax.random.normal(k_cb, (len(KERNEL_SIZES), C))).astype(jnp.float32)
    wc = (0.1 * jax.random.normal(k_wc, (F, NUM_LABELS))).astype(jnp.float32)
    bc = (0.1 * jax.random.normal(k_bc, (NUM_LABELS,))).astype(jnp.float32)

    logits = kimcnn_forward(ids, embed_table, conv_ws, conv_bs, wc, bc)
    logits = jax.block_until_ready(logits)

    ref = reference_forward(ids, embed_table, conv_ws, conv_bs, wc, bc)
    assert logits.shape == (B, NUM_LABELS)
    # bf16 matmul operands vs f32 reference -> allow a bf16-scale tolerance.
    assert jnp.allclose(logits, ref, atol=2e-2, rtol=2e-2), (logits, ref)

    print("KERNEL_OK")
</pallas_src>

<mosaic_0001>
module attributes {stable_mosaic.version = 11 : i64} {
  func.func @kimcnn_kernel(%arg0: i32, %arg1: memref<8x16x128xbf16, #tpu.memory_space<vmem>>, %arg2: memref<128x128xbf16, #tpu.memory_space<vmem>>, %arg3: memref<1x128xf32, #tpu.memory_space<vmem>>, %arg4: memref<16x128xf32, #tpu.memory_space<vmem>>, %arg5: memref<128x128xbf16, #tpu.memory_space<vmem>>, %arg6: memref<1x128xf32, #tpu.memory_space<vmem>>, %arg7: memref<8x128xf32, #tpu.memory_space<vmem>>) attributes {dimension_semantics = [#tpu.dimension_semantics<parallel>], iteration_bounds = array<i64: 1>, scalar_prefetch = 0 : i64, scratch_operands = 0 : i64, tpu.core_type = #tpu.core_type<tc>, window_params = [{transform_indices = @transform_0, window_bounds = array<i64: 8, 16, 128>}, {pipeline_mode = #tpu.pipeline_mode<synchronous>, transform_indices = @transform_1, window_bounds = array<i64: 128, 128>}, {pipeline_mode = #tpu.pipeline_mode<synchronous>, transform_indices = @transform_2, window_bounds = array<i64: 1, 128>}, {pipeline_mode = #tpu.pipeline_mode<synchronous>, transform_indices = @transform_3, window_bounds = array<i64: 16, 128>}, {pipeline_mode = #tpu.pipeline_mode<synchronous>, transform_indices = @transform_4, window_bounds = array<i64: 128, 128>}, {pipeline_mode = #tpu.pipeline_mode<synchronous>, transform_indices = @transform_5, window_bounds = array<i64: 1, 128>}, {transform_indices = @transform_6, window_bounds = array<i64: 8, 128>}]} {
    %c0 = arith.constant 0 : index
    %c0_0 = arith.constant 0 : index
    %c0_1 = arith.constant 0 : index
    %0 = vector.load %arg1[%c0, %c0_0, %c0_1] : memref<8x16x128xbf16, #tpu.memory_space<vmem>>, vector<8x16x128xbf16>
    %1 = vector.shape_cast %0 : vector<8x16x128xbf16> to vector<128x128xbf16>
    %c0_2 = arith.constant 0 : index
    %c0_3 = arith.constant 0 : index
    %2 = vector.load %arg2[%c0_2, %c0_3] : memref<128x128xbf16, #tpu.memory_space<vmem>>, vector<128x128xbf16>
    %cst = arith.constant dense<0.000000e+00> : vector<128x128xf32>
    %3 = tpu.matmul %1, %2, %cst {dimension_numbers = #tpu.dot_dimension_numbers<[1], [0], [0], [1], [0, 0, 1, 1], [], []>} : vector<128x128xbf16>, vector<128x128xbf16>, vector<128x128xf32> -> vector<128x128xf32>
    %4 = vector.shape_cast %3 : vector<128x128xf32> to vector<8x16x128xf32>
    %c0_4 = arith.constant 0 : index
    %c0_5 = arith.constant 0 : index
    %5 = vector.load %arg3[%c0_4, %c0_5] : memref<1x128xf32, #tpu.memory_space<vmem>>, vector<1x128xf32>
    %6 = vector.shape_cast %5 : vector<1x128xf32> to vector<1x1x128xf32>
    %7 = vector.broadcast %6 : vector<1x1x128xf32> to vector<8x16x128xf32>
    %8 = arith.addf %4, %7 : vector<8x16x128xf32>
    %cst_6 = arith.constant 0.000000e+00 : f32
    %9 = vector.broadcast %cst_6 : f32 to vector<8x16x128xf32>
    %10 = arith.maximumf %8, %9 : vector<8x16x128xf32>
    %c0_7 = arith.constant 0 : index
    %c0_8 = arith.constant 0 : index
    %11 = vector.load %arg4[%c0_7, %c0_8] : memref<16x128xf32, #tpu.memory_space<vmem>>, vector<16x128xf32>
    %12 = vector.shape_cast %11 : vector<16x128xf32> to vector<1x16x128xf32>
    %13 = vector.broadcast %12 : vector<1x16x128xf32> to vector<8x16x128xf32>
    %14 = arith.mulf %10, %13 : vector<8x16x128xf32>
    %cst_9 = arith.constant dense<0xFF800000> : vector<8x128xf32>
    %15 = vector.multi_reduction <maximumf>, %14, %cst_9 [1] : vector<8x16x128xf32> to vector<8x128xf32>
    %16 = arith.truncf %15 : vector<8x128xf32> to vector<8x128xbf16>
    %c0_10 = arith.constant 0 : index
    %c0_11 = arith.constant 0 : index
    %17 = vector.load %arg5[%c0_10, %c0_11] : memref<128x128xbf16, #tpu.memory_space<vmem>>, vector<128x128xbf16>
    %cst_12 = arith.constant dense<0.000000e+00> : vector<8x128xf32>
    %18 = tpu.matmul %16, %17, %cst_12 {dimension_numbers = #tpu.dot_dimension_numbers<[1], [0], [0], [1], [0, 0, 1, 1], [], []>} : vector<8x128xbf16>, vector<128x128xbf16>, vector<8x128xf32> -> vector<8x128xf32>
    %c0_13 = arith.constant 0 : index
    %c0_14 = arith.constant 0 : index
    %19 = vector.load %arg6[%c0_13, %c0_14] : memref<1x128xf32, #tpu.memory_space<vmem>>, vector<1x128xf32>
    %20 = vector.broadcast %19 : vector<1x128xf32> to vector<8x128xf32>
    %21 = arith.addf %18, %20 : vector<8x128xf32>
    %c0_15 = arith.constant 0 : index
    %c0_16 = arith.constant 0 : index
    %22 = vector.load %arg7[%c0_15, %c0_16] : memref<8x128xf32, #tpu.memory_space<vmem>>, vector<8x128xf32>
    tpu.vector_store %arg7[%c0_15, %c0_16], %21 {strides = array<i32>} : memref<8x128xf32, #tpu.memory_space<vmem>>, vector<8x128xf32>,
    return
  }
  func.func @transform_0(%arg0: i32) -> (i32, i32, i32) {
    %c0_i32 = arith.constant 0 : i32
    %c0_i32_0 = arith.constant 0 : i32
    %c0_i32_1 = arith.constant 0 : i32
    return %arg0, %c0_i32, %c0_i32_0 : i32, i32, i32
  }
  func.func @transform_1(%arg0: i32) -> (i32, i32) {
    %c0_i32 = arith.constant 0 : i32
    %c0_i32_0 = arith.constant 0 : i32
    %c0_i32_1 = arith.constant 0 : i32
    return %c0_i32, %c0_i32_0 : i32, i32
  }
  func.func @transform_2(%arg0: i32) -> (i32, i32) {
    %c0_i32 = arith.constant 0 : i32
    %c0_i32_0 = arith.constant 0 : i32
    %c0_i32_1 = arith.constant 0 : i32
    return %c0_i32, %c0_i32_0 : i32, i32
  }
  func.func @transform_3(%arg0: i32) -> (i32, i32) {
    %c0_i32 = arith.constant 0 : i32
    %c0_i32_0 = arith.constant 0 : i32
    %c0_i32_1 = arith.constant 0 : i32
    return %c0_i32, %c0_i32_0 : i32, i32
  }
  func.func @transform_4(%arg0: i32) -> (i32, i32) {
    %c0_i32 = arith.constant 0 : i32
    %c0_i32_0 = arith.constant 0 : i32
    %c0_i32_1 = arith.constant 0 : i32
    return %c0_i32, %c0_i32_0 : i32, i32
  }
  func.func @transform_5(%arg0: i32) -> (i32, i32) {
    %c0_i32 = arith.constant 0 : i32
    %c0_i32_0 = arith.constant 0 : i32
    %c0_i32_1 = arith.constant 0 : i32
    return %c0_i32, %c0_i32_0 : i32, i32
  }
  func.func @transform_6(%arg0: i32) -> (i32, i32) {
    %c0_i32 = arith.constant 0 : i32
    %c0_i32_0 = arith.constant 0 : i32
    return %arg0, %c0_i32 : i32, i32
  }
}

</mosaic_0001>

<llo_original>
// kernel: tpu_custom_call.1
$region0: #{tpu_custom_call.1}
  #allocation0 [shape = 'u32[]', space=smem, size = 0x4, offset = 0x4, fixed_abs, tag = 'smem constant byte address 0x4 - core index']
  #allocation1 [shape = 'u32[144,128]{1,0:T(1,128)}', space=vmem, size = 0x12000, scoped, tag = 'internal scratch']
  %s0 = inlined_call_operand.hbm [shape: bf16[8,16,128], index: 0, kind: input, shape index: {}]
  %s1 = inlined_call_operand.hbm [shape: bf16[128,128], index: 1, kind: input, shape index: {}]
  %s2 = inlined_call_operand.vmem [shape: f32[1,128], index: 2, kind: input, shape index: {}]
  %s3 = inlined_call_operand.hbm [shape: f32[16,128], index: 3, kind: input, shape index: {}]
  %s4 = inlined_call_operand.hbm [shape: bf16[128,128], index: 4, kind: input, shape index: {}]
  %s5 = inlined_call_operand.vmem [shape: f32[1,128], index: 5, kind: input, shape index: {}]
  %s6 = inlined_call_operand.hbm [shape: f32[8,128], index: 6, kind: output, shape index: {}]
  %s7 = sld [smem:[#allocation0]]
  $region50: #{tpu_custom_call.1} parent=0
    _
  %s9 = ssub.s32 1, %s7
  %s10 = scalar_select 0, %s9, %s7
  $region1: #{tpu_custom_call.1} parent=0
    #allocation2 [shape = 'u8[32768]{0}', space=vmem, size = 0x8000, scoped, tag = 'input window, operand 0, single buffered']
    #allocation3 [shape = 's32[1]{0}', space=sflag, size = 0x4, scoped, tag = 'scoped memory for tpu_custom_call.1']
    #allocation4 [shape = 's32[1]{0}', space=sflag, size = 0x4, scoped, tag = 'scoped memory for tpu_custom_call.1']
    #allocation5 [shape = 'u8[32768]{0}', space=vmem, size = 0x8000, scoped, tag = 'input window, operand 1, single buffered']
    #allocation6 [shape = 's32[1]{0}', space=sflag, size = 0x4, scoped, tag = 'scoped memory for tpu_custom_call.1']
    #allocation7 [shape = 'u8[8192]{0}', space=vmem, size = 0x2000, scoped, tag = 'input window, operand 3, single buffered']
    #allocation8 [shape = 'u8[32768]{0}', space=vmem, size = 0x8000, scoped, tag = 'input window, operand 4, single buffered']
    #allocation9 [shape = 's32[1]{0}', space=sflag, size = 0x4, scoped, tag = 'scoped memory for tpu_custom_call.1']
    #allocation10 [shape = 'u8[4096]{0}', space=vmem, size = 0x1000, scoped, tag = 'output window, operand 0, single buffered']
    %11 = vsyncpa [#allocation3], 0
    %12 = vsyncpa [#allocation6], 0
    %13 = vsyncpa [#allocation9], 0
    %14 = vsyncpa [#allocation4], 0
    // Predicated region
    $region2: #{tpu_custom_call.1} parent=1 // pred_check
      _
    $region3: #{tpu_custom_call.1} parent=1 // pred_check_branch
      %16 = sbr.rel (0) target = $region5
    $region4: #{tpu_custom_call.1} parent=1 // pred_region
      %s18 = ssub.s32 1024, 1024
      %19 = vsyncadd [#allocation3], %s18
      %s20 = sshll.u32 [#allocation2], 4
      %s21 = int_to_ptr.vmem [resolvable:$true] %s20
      %26 = dma.hbm_to_vmem [thread:$0]  %s0, 1024, %s21, [#allocation3], 64, 64, 4
    $region5: #{tpu_custom_call.1} parent=1 // pred_fallthru
      _
    // Predicated region
    $region6: #{tpu_custom_call.1} parent=1 // pred_check
      _
    $region7: #{tpu_custom_call.1} parent=1 // pred_check_branch
      %28 = sbr.rel (0) target = $region9
    $region8: #{tpu_custom_call.1} parent=1 // pred_region
      %s30 = ssub.s32 1024, 1024
      %31 = vsyncadd [#allocation6], %s30
      %s32 = sshll.u32 [#allocation5], 4
      %s33 = int_to_ptr.vmem [resolvable:$true] %s32
      %38 = dma.hbm_to_vmem [thread:$0]  %s1, 1024, %s33, [#allocation6], 64, 64, 4
    $region9: #{tpu_custom_call.1} parent=1 // pred_fallthru
      _
    // Predicated region
    $region10: #{tpu_custom_call.1} parent=1 // pred_check
      _
    $region11: #{tpu_custom_call.1} parent=1 // pred_check_branch
      %40 = sbr.rel (0) target = $region13
    $region12: #{tpu_custom_call.1} parent=1 // pred_region
      _
    $region13: #{tpu_custom_call.1} parent=1 // pred_fallthru
      _
    // Predicated region
    $region14: #{tpu_custom_call.1} parent=1 // pred_check
      _
    $region15: #{tpu_custom_call.1} parent=1 // pred_check_branch
      %42 = sbr.rel (0) target = $region17
    $region16: #{tpu_custom_call.1} parent=1 // pred_region
      %s44 = ssub.s32 256, 256
      %45 = vsyncadd [#allocation6], %s44
      %s46 = sshll.u32 [#allocation7], 4
      %s47 = int_to_ptr.vmem [resolvable:$true] %s46
      %52 = dma.hbm_to_vmem [thread:$0]  %s3, 256, %s47, [#allocation6], 128, 128, 8
    $region17: #{tpu_custom_call.1} parent=1 // pred_fallthru
      _
    // Predicated region
    $region18: #{tpu_custom_call.1} parent=1 // pred_check
      _
    $region19: #{tpu_custom_call.1} parent=1 // pred_check_branch
      %54 = sbr.rel (0) target = $region21
    $region20: #{tpu_custom_call.1} parent=1 // pred_region
      %s56 = ssub.s32 1024, 1024
      %57 = vsyncadd [#allocation9], %s56
      %s58 = sshll.u32 [#allocation8], 4
      %s59 = int_to_ptr.vmem [resolvable:$true] %s58
      %64 = dma.hbm_to_vmem [thread:$0]  %s4, 1024, %s59, [#allocation9], 64, 64, 4
    $region21: #{tpu_custom_call.1} parent=1 // pred_fallthru
      _
    // Predicated region
    $region22: #{tpu_custom_call.1} parent=1 // pred_check
      _
    $region23: #{tpu_custom_call.1} parent=1 // pred_check_branch
      %66 = sbr.rel (0) target = $region25
    $region24: #{tpu_custom_call.1} parent=1 // pred_region
      _
    $region25: #{tpu_custom_call.1} parent=1 // pred_fallthru
      _
    // Predicated region
    $region26: #{tpu_custom_call.1} parent=1 // pred_check
      _
    $region27: #{tpu_custom_call.1} parent=1 // pred_check_branch
      %68 = sbr.rel (0) target = $region29
    $region28: #{tpu_custom_call.1} parent=1 // pred_region
      %69 = dma.done [#allocation3], 1024
    $region29: #{tpu_custom_call.1} parent=1 // pred_fallthru
      _
    // Predicated region
    $region30: #{tpu_custom_call.1} parent=1 // pred_check
      _
    $region31: #{tpu_custom_call.1} parent=1 // pred_check_branch
      %71 = sbr.rel (0) target = $region33
    $region32: #{tpu_custom_call.1} parent=1 // pred_region
      %72 = dma.done [#allocation6], 1024
    $region33: #{tpu_custom_call.1} parent=1 // pred_fallthru
      _
    // Predicated region
    $region34: #{tpu_custom_call.1} parent=1 // pred_check
      _
    $region35: #{tpu_custom_call.1} parent=1 // pred_check_branch
      %74 = sbr.rel (0) target = $region37
    $region36: #{tpu_custom_call.1} parent=1 // pred_region
      %75 = dma.done [#allocation6], 256
    $region37: #{tpu_custom_call.1} parent=1 // pred_fallthru
      _
    // Predicated region
    $region38: #{tpu_custom_call.1} parent=1 // pred_check
      _
    $region39: #{tpu_custom_call.1} parent=1 // pred_check_branch
      %77 = sbr.rel (0) target = $region41
    $region40: #{tpu_custom_call.1} parent=1 // pred_region
      %78 = dma.done [#allocation9], 1024
    $region41: #{tpu_custom_call.1} parent=1 // pred_fallthru
      _
    %v80 = vld [vmem:[#allocation2] sm:$0xf]
    %v81 = vld [vmem:[#allocation2 + $0x4] sm:$0xf]
    %v82 = vld [vmem:[#allocation2 + $0x8] sm:$0xf]
    %v83 = vld [vmem:[#allocation2 + $0xc] sm:$0xf]
    %v84 = vld [vmem:[#allocation2 + $0x10] sm:$0xf]
    %v85 = vld [vmem:[#allocation2 + $0x14] sm:$0xf]
    %v86 = vld [vmem:[#allocation2 + $0x18] sm:$0xf]
    %v87 = vld [vmem:[#allocation2 + $0x1c] sm:$0xf]
    %v88 = vld [vmem:[#allocation2 + $0x20] sm:$0xf]
    %v89 = vld [vmem:[#allocation2 + $0x24] sm:$0xf]
    %v90 = vld [vmem:[#allocation2 + $0x28] sm:$0xf]
    %v91 = vld [vmem:[#allocation2 + $0x2c] sm:$0xf]
    %v92 = vld [vmem:[#allocation2 + $0x30] sm:$0xf]
    %v93 = vld [vmem:[#allocation2 + $0x34] sm:$0xf]
    %v94 = vld [vmem:[#allocation2 + $0x38] sm:$0xf]
    %v95 = vld [vmem:[#allocation2 + $0x3c] sm:$0xf]
    %v96 = vld [vmem:[#allocation5] sm:$0xf]
    %v97 = vld [vmem:[#allocation5 + $0x4] sm:$0xf]
    %v98 = vld [vmem:[#allocation5 + $0x8] sm:$0xf]
    %v99 = vld [vmem:[#allocation5 + $0xc] sm:$0xf]
    %v100 = vld [vmem:[#allocation5 + $0x10] sm:$0xf]
    %v101 = vld [vmem:[#allocation5 + $0x14] sm:$0xf]
    %v102 = vld [vmem:[#allocation5 + $0x18] sm:$0xf]
    %v103 = vld [vmem:[#allocation5 + $0x1c] sm:$0xf]
    %v104 = vld [vmem:[#allocation5 + $0x20] sm:$0xf]
    %v105 = vld [vmem:[#allocation5 + $0x24] sm:$0xf]
    %v106 = vld [vmem:[#allocation5 + $0x28] sm:$0xf]
    %v107 = vld [vmem:[#allocation5 + $0x2c] sm:$0xf]
    %v108 = vld [vmem:[#allocation5 + $0x30] sm:$0xf]
    %v109 = vld [vmem:[#allocation5 + $0x34] sm:$0xf]
    %v110 = vld [vmem:[#allocation5 + $0x38] sm:$0xf]
    %v111 = vld [vmem:[#allocation5 + $0x3c] sm:$0xf]
    %v128 = vunpack.c.l.b16 %v80
    %v129 = vunpack.c.l.b16 %v81
    %v130 = vunpack.c.l.b16 %v82
    %v131 = vunpack.c.l.b16 %v83
    %v132 = vunpack.c.l.b16 %v84
    %v133 = vunpack.c.l.b16 %v85
    %v134 = vunpack.c.l.b16 %v86
    %v135 = vunpack.c.l.b16 %v87
    %v136 = vunpack.c.l.b16 %v88
    %v137 = vunpack.c.l.b16 %v89
    %v138 = vunpack.c.l.b16 %v90
    %v139 = vunpack.c.l.b16 %v91
    %v140 = vunpack.c.l.b16 %v92
    %v141 = vunpack.c.l.b16 %v93
    %v142 = vunpack.c.l.b16 %v94
    %v143 = vunpack.c.l.b16 %v95
    %v144 = vpack.c.b16 %v129, %v128
    %v145 = vpack.c.b16 %v131, %v130
    %v146 = vpack.c.b16 %v133, %v132
    %v147 = vpack.c.b16 %v135, %v134
    %v148 = vpack.c.b16 %v137, %v136
    %v149 = vpack.c.b16 %v139, %v138
    %v150 = vpack.c.b16 %v141, %v140
    %v151 = vpack.c.b16 %v143, %v142
    %v176 = vunpack.c.l.b16 %v96
    %v177 = vunpack.c.l.b16 %v97
    %v178 = vunpack.c.l.b16 %v98
    %v179 = vunpack.c.l.b16 %v99
    %v180 = vunpack.c.l.b16 %v100
    %v181 = vunpack.c.l.b16 %v101
    %v182 = vunpack.c.l.b16 %v102
    %v183 = vunpack.c.l.b16 %v103
    %v184 = vunpack.c.l.b16 %v104
    %v185 = vunpack.c.l.b16 %v105
    %v186 = vunpack.c.l.b16 %v106
    %v187 = vunpack.c.l.b16 %v107
    %v188 = vunpack.c.l.b16 %v108
    %v189 = vunpack.c.l.b16 %v109
    %v190 = vunpack.c.l.b16 %v110
    %v191 = vunpack.c.l.b16 %v111
    %v192 = vpack.c.b16 %v177, %v176
    %v193 = vpack.c.b16 %v179, %v178
    %v194 = vpack.c.b16 %v181, %v180
    %v195 = vpack.c.b16 %v183, %v182
    %v196 = vpack.c.b16 %v185, %v184
    %v197 = vpack.c.b16 %v187, %v186
    %v198 = vpack.c.b16 %v189, %v188
    %v199 = vpack.c.b16 %v191, %v190
    %208 = vmatprep.subr.bf16.mxu0 0
    %209 = vmatpush1.bf16.msra.mxu0 %v192
    %210 = vmatprep.subr.bf16.mxu0 0
    %211 = vmatpush1.bf16.msra.mxu0 %v193
    %212 = vmatprep.subr.bf16.mxu0 0
    %213 = vmatpush1.bf16.msra.mxu0 %v194
    %214 = vmatprep.subr.bf16.mxu0 0
    %215 = vmatpush1.bf16.msra.mxu0 %v195
    %216 = vmatprep.subr.bf16.mxu0 0
    %217 = vmatpush1.bf16.msra.mxu0 %v196
    %218 = vmatprep.subr.bf16.mxu0 0
    %219 = vmatpush1.bf16.msra.mxu0 %v197
    %220 = vmatprep.subr.bf16.mxu0 0
    %221 = vmatpush1.bf16.msra.mxu0 %v198
    %222 = vmatprep.subr.bf16.mxu0 0
    %223 = vmatpush1.bf16.msra.mxu0 %v199
    %224 = vmatprep.subr.bf16.mxu0 0
    %225 = vmatpush1.bf16.msra.mxu0 0
    %226 = vmatprep.subr.bf16.mxu0 0
    %227 = vmatpush1.bf16.msra.mxu0 0
    %228 = vmatprep.subr.bf16.mxu0 0
    %229 = vmatpush1.bf16.msra.mxu0 0
    %230 = vmatprep.subr.bf16.mxu0 0
    %231 = vmatpush1.bf16.msra.mxu0 0
    %232 = vmatprep.subr.bf16.mxu0 0
    %233 = vmatpush1.bf16.msra.mxu0 0
    %234 = vmatprep.subr.bf16.mxu0 0
    %235 = vmatpush1.bf16.msra.mxu0 0
    %236 = vmatprep.subr.bf16.mxu0 0
    %237 = vmatpush1.bf16.msra.mxu0 0
    %238 = vmatprep.subr.bf16.mxu0 0
    %239 = vmatpush1.bf16.msra.mxu0 0
    %240 = vmatprep.mubr.bf16.mxu0 0
    %241 = vmatmul.mubr.bf16.gmra.mrb[0].mxu0 %v144
    %v242 = vpop.f32.mrb[0].mxu0
    %v243 = vadd.f32 0.0, %v242
    %v244 = vpop.f32.mrb[0].mxu0
    %v245 = vpop.f32.mrb[0].mxu0
    %v246 = vadd.f32 0.0, %v245
    %v247 = vpop.f32.mrb[0].mxu0
    %248 = vmatprep.mubr.bf16.mxu0 0
    %249 = vmatmul.mubr.bf16.gmra.mrb[0].mxu0 %v145
    %v250 = vpop.f32.mrb[0].mxu0
    %v251 = vadd.f32 0.0, %v250
    %v252 = vpop.f32.mrb[0].mxu0
    %v253 = vpop.f32.mrb[0].mxu0
    %v254 = vadd.f32 0.0, %v253
    %v255 = vpop.f32.mrb[0].mxu0
    %256 = vmatprep.mubr.bf16.mxu0 0
    %257 = vmatmul.mubr.bf16.gmra.mrb[0].mxu0 %v146
    %v258 = vpop.f32.mrb[0].mxu0
    %v259 = vadd.f32 0.0, %v258
    %v260 = vpop.f32.mrb[0].mxu0
    %v261 = vpop.f32.mrb[0].mxu0
    %v262 = vadd.f32 0.0, %v261
    %v263 = vpop.f32.mrb[0].mxu0
    %264 = vmatprep.mubr.bf16.mxu0 0
    %265 = vmatmul.mubr.bf16.gmra.mrb[0].mxu0 %v147
    %v266 = vpop.f32.mrb[0].mxu0
    %v267 = vadd.f32 0.0, %v266
    %v268 = vpop.f32.mrb[0].mxu0
    %v269 = vpop.f32.mrb[0].mxu0
    %v270 = vadd.f32 0.0, %v269
    %v271 = vpop.f32.mrb[0].mxu0
    %272 = vmatprep.mubr.bf16.mxu0 0
    %273 = vmatmul.mubr.bf16.gmra.mrb[0].mxu0 %v148
    %v274 = vpop.f32.mrb[0].mxu0
    %v275 = vadd.f32 0.0, %v274
    %v276 = vpop.f32.mrb[0].mxu0
    %v277 = vpop.f32.mrb[0].mxu0
    %v278 = vadd.f32 0.0, %v277
    %v279 = vpop.f32.mrb[0].mxu0
    %280 = vmatprep.mubr.bf16.mxu0 0
    %281 = vmatmul.mubr.bf16.gmra.mrb[0].mxu0 %v149
    %v282 = vpop.f32.mrb[0].mxu0
    %v283 = vadd.f32 0.0, %v282
    %v284 = vpop.f32.mrb[0].mxu0
    %v285 = vpop.f32.mrb[0].mxu0
    %v286 = vadd.f32 0.0, %v285
    %v287 = vpop.f32.mrb[0].mxu0
    %288 = vmatprep.mubr.bf16.mxu0 0
    %289 = vmatmul.mubr.bf16.gmra.mrb[0].mxu0 %v150
    %v290 = vpop.f32.mrb[0].mxu0
    %v291 = vadd.f32 0.0, %v290
    %v292 = vpop.f32.mrb[0].mxu0
    %v293 = vpop.f32.mrb[0].mxu0
    %v294 = vadd.f32 0.0, %v293
    %v295 = vpop.f32.mrb[0].mxu0
    %296 = vmatprep.mubr.bf16.mxu0 0
    %297 = vmatmul.mubr.bf16.gmra.mrb[0].mxu0 %v151
    %v298 = vpop.f32.mrb[0].mxu0
    %v299 = vadd.f32 0.0, %v298
    %v300 = vpop.f32.mrb[0].mxu0
    %v301 = vpop.f32.mrb[0].mxu0
    %v302 = vadd.f32 0.0, %v301
    %v303 = vpop.f32.mrb[0].mxu0
    %304 = vdwg.mxu0
    %v305 = vld [vmem:[%s2] sm:$0x1]
    %v307 = vlaneseq
    %v308 = vshrl.u32 %v307, 7
    %v309 = vsub.s32 0, %v308
    %v310 = vrot.slane %v305, %v309
    %v312 = vadd.f32 %v243, %v310
    %v313 = vadd.f32 %v246, %v310
    %v314 = vadd.f32 %v251, %v310
    %v315 = vadd.f32 %v254, %v310
    %v316 = vadd.f32 %v259, %v310
    %v317 = vadd.f32 %v262, %v310
    %v318 = vadd.f32 %v267, %v310
    %v319 = vadd.f32 %v270, %v310
    %v320 = vadd.f32 %v275, %v310
    %v321 = vadd.f32 %v278, %v310
    %v322 = vadd.f32 %v283, %v310
    %v323 = vadd.f32 %v286, %v310
    %v324 = vadd.f32 %v291, %v310
    %v325 = vadd.f32 %v294, %v310
    %v326 = vadd.f32 %v299, %v310
    %v327 = vadd.f32 %v302, %v310
    %v328 = vmax.f32 %v312, 0.0
    %v329 = vmax.f32 %v313, 0.0
    %v330 = vmax.f32 %v314, 0.0
    %v331 = vmax.f32 %v315, 0.0
    %v332 = vmax.f32 %v316, 0.0
    %v333 = vmax.f32 %v317, 0.0
    %v334 = vmax.f32 %v318, 0.0
    %v335 = vmax.f32 %v319, 0.0
    %v336 = vmax.f32 %v320, 0.0
    %v337 = vmax.f32 %v321, 0.0
    %v338 = vmax.f32 %v322, 0.0
    %v339 = vmax.f32 %v323, 0.0
    %v340 = vmax.f32 %v324, 0.0
    %v341 = vmax.f32 %v325, 0.0
    %v342 = vmax.f32 %v326, 0.0
    %v343 = vmax.f32 %v327, 0.0
    %v344 = vld [vmem:[#allocation7] sm:$0xff]
    %v345 = vld [vmem:[#allocation7 + $0x8] sm:$0xff]
    %v346 = vmul.f32 %v328, %v344
    %v347 = vmul.f32 %v329, %v345
    %v348 = vmul.f32 %v330, %v344
    %v349 = vmul.f32 %v331, %v345
    %v350 = vmul.f32 %v332, %v344
    %v351 = vmul.f32 %v333, %v345
    %v352 = vmul.f32 %v334, %v344
    %v353 = vmul.f32 %v335, %v345
    %v354 = vmul.f32 %v336, %v344
    %v355 = vmul.f32 %v337, %v345
    %v356 = vmul.f32 %v338, %v344
    %v357 = vmul.f32 %v339, %v345
    %v358 = vmul.f32 %v340, %v344
    %v359 = vmul.f32 %v341, %v345
    %v360 = vmul.f32 %v342, %v344
    %v361 = vmul.f32 %v343, %v345
    %v362 = vmax.f32 %v346, %v347
    %v363 = vrot.slane %v362, 4
    %v364 = vmax.f32 %v362, %v363
    %v365 = vrot.slane %v364, 2
    %v366 = vmax.f32 %v364, %v365
    %v367 = vrot.slane %v366, 1
    %v368 = vmax.f32 %v366, %v367
    %v369 = vmax.f32 %v348, %v349
    %v370 = vrot.slane %v369, 4
    %v371 = vmax.f32 %v369, %v370
    %v372 = vrot.slane %v371, 2
    %v373 = vmax.f32 %v371, %v372
    %v374 = vrot.slane %v373, 1
    %v375 = vmax.f32 %v373, %v374
    %v376 = vmax.f32 %v350, %v351
    %v377 = vrot.slane %v376, 4
    %v378 = vmax.f32 %v376, %v377
    %v379 = vrot.slane %v378, 2
    %v380 = vmax.f32 %v378, %v379
    %v381 = vrot.slane %v380, 1
    %v382 = vmax.f32 %v380, %v381
    %v383 = vmax.f32 %v352, %v353
    %v384 = vrot.slane %v383, 4
    %v385 = vmax.f32 %v383, %v384
    %v386 = vrot.slane %v385, 2
    %v387 = vmax.f32 %v385, %v386
    %v388 = vrot.slane %v387, 1
    %v389 = vmax.f32 %v387, %v388
    %v390 = vmax.f32 %v354, %v355
    %v391 = vrot.slane %v390, 4
    %v392 = vmax.f32 %v390, %v391
    %v393 = vrot.slane %v392, 2
    %v394 = vmax.f32 %v392, %v393
    %v395 = vrot.slane %v394, 1
    %v396 = vmax.f32 %v394, %v395
    %v397 = vmax.f32 %v356, %v357
    %v398 = vrot.slane %v397, 4
    %v399 = vmax.f32 %v397, %v398
    %v400 = vrot.slane %v399, 2
    %v401 = vmax.f32 %v399, %v400
    %v402 = vrot.slane %v401, 1
    %v403 = vmax.f32 %v401, %v402
    %v404 = vmax.f32 %v358, %v359
    %v405 = vrot.slane %v404, 4
    %v406 = vmax.f32 %v404, %v405
    %v407 = vrot.slane %v406, 2
    %v408 = vmax.f32 %v406, %v407
    %v409 = vrot.slane %v408, 1
    %v410 = vmax.f32 %v408, %v409
    %v411 = vmax.f32 %v360, %v361
    %v412 = vrot.slane %v411, 4
    %v413 = vmax.f32 %v411, %v412
    %v414 = vrot.slane %v413, 2
    %v415 = vmax.f32 %v413, %v414
    %v416 = vrot.slane %v415, 1
    %v417 = vmax.f32 %v415, %v416
    %v418 = vpack.c.bf16 %v368, %v368
    %v419 = vpack.c.bf16 %v375, %v375
    %v420 = vpack.c.bf16 %v382, %v382
    %v421 = vpack.c.bf16 %v389, %v389
    %v422 = vpack.c.bf16 %v396, %v396
    %v423 = vpack.c.bf16 %v403, %v403
    %v424 = vpack.c.bf16 %v410, %v410
    %v425 = vpack.c.bf16 %v417, %v417
    %v426 = vld [vmem:[#allocation8] sm:$0xf]
    %v427 = vld [vmem:[#allocation8 + $0x4] sm:$0xf]
    %v428 = vld [vmem:[#allocation8 + $0x8] sm:$0xf]
    %v429 = vld [vmem:[#allocation8 + $0xc] sm:$0xf]
    %v430 = vld [vmem:[#allocation8 + $0x10] sm:$0xf]
    %v431 = vld [vmem:[#allocation8 + $0x14] sm:$0xf]
    %v432 = vld [vmem:[#allocation8 + $0x18] sm:$0xf]
    %v433 = vld [vmem:[#allocation8 + $0x1c] sm:$0xf]
    %v434 = vld [vmem:[#allocation8 + $0x20] sm:$0xf]
    %v435 = vld [vmem:[#allocation8 + $0x24] sm:$0xf]
    %v436 = vld [vmem:[#allocation8 + $0x28] sm:$0xf]
    %v437 = vld [vmem:[#allocation8 + $0x2c] sm:$0xf]
    %v438 = vld [vmem:[#allocation8 + $0x30] sm:$0xf]
    %v439 = vld [vmem:[#allocation8 + $0x34] sm:$0xf]
    %v440 = vld [vmem:[#allocation8 + $0x38] sm:$0xf]
    %v441 = vld [vmem:[#allocation8 + $0x3c] sm:$0xf]
    %v442 = vld [vmem:[%s5] sm:$0x1]
    %v444 = vlaneseq
    %v445 = vshrl.u32 %v444, 7
    %v446 = vsub.s32 0, %v445
    %v447 = vrot.slane %v442, %v446
    %v457 = vunpack.c.l.b16 %v418
    %v458 = vunpack.c.l.b16 %v419
    %v459 = vunpack.c.l.b16 %v420
    %v460 = vunpack.c.l.b16 %v421
    %v461 = vunpack.c.l.b16 %v422
    %v462 = vunpack.c.l.b16 %v423
    %v463 = vunpack.c.l.b16 %v424
    %v464 = vunpack.c.l.b16 %v425
    %vm465 = vcmask 1041409
    %v466 = vsel %vm465, %v458, %v457
    %vm467 = vcmask 1042434
    %v468 = vsel %vm467, %v459, %v466
    %vm469 = vcmask 1043459
    %v470 = vsel %vm469, %v460, %v468
    %vm471 = vcmask 1044484
    %v472 = vsel %vm471, %v461, %v470
    %vm473 = vcmask 1045509
    %v474 = vsel %vm473, %v462, %v472
    %vm475 = vcmask 1046534
    %v476 = vsel %vm475, %v463, %v474
    %vm477 = vcmask 1047559
    %v478 = vsel %vm477, %v464, %v476
    %v479 = vpack.c.b16 %v478, %v478
    %v497 = vunpack.c.l.b16 %v426
    %v498 = vunpack.c.l.b16 %v427
    %v499 = vunpack.c.l.b16 %v428
    %v500 = vunpack.c.l.b16 %v429
    %v501 = vunpack.c.l.b16 %v430
    %v502 = vunpack.c.l.b16 %v431
    %v503 = vunpack.c.l.b16 %v432
    %v504 = vunpack.c.l.b16 %v433
    %v505 = vunpack.c.l.b16 %v434
    %v506 = vunpack.c.l.b16 %v435
    %v507 = vunpack.c.l.b16 %v436
    %v508 = vunpack.c.l.b16 %v437
    %v509 = vunpack.c.l.b16 %v438
    %v510 = vunpack.c.l.b16 %v439
    %v511 = vunpack.c.l.b16 %v440
    %v512 = vunpack.c.l.b16 %v441
    %v513 = vpack.c.b16 %v498, %v497
    %v514 = vpack.c.b16 %v500, %v499
    %v515 = vpack.c.b16 %v502, %v501
    %v516 = vpack.c.b16 %v504, %v503
    %v517 = vpack.c.b16 %v506, %v505
    %v518 = vpack.c.b16 %v508, %v507
    %v519 = vpack.c.b16 %v510, %v509
    %v520 = vpack.c.b16 %v512, %v511
    %529 = vmatprep.subr.bf16.mxu0 0
    %530 = vmatpush1.bf16.msra.mxu0 %v513
    %531 = vmatprep.subr.bf16.mxu0 0
    %532 = vmatpush1.bf16.msra.mxu0 %v514
    %533 = vmatprep.subr.bf16.mxu0 0
    %534 = vmatpush1.bf16.msra.mxu0 %v515
    %535 = vmatprep.subr.bf16.mxu0 0
    %536 = vmatpush1.bf16.msra.mxu0 %v516
    %537 = vmatprep.subr.bf16.mxu0 0
    %538 = vmatpush1.bf16.msra.mxu0 %v517
    %539 = vmatprep.subr.bf16.mxu0 0
    %540 = vmatpush1.bf16.msra.mxu0 %v518
    %541 = vmatprep.subr.bf16.mxu0 0
    %542 = vmatpush1.bf16.msra.mxu0 %v519
    %543 = vmatprep.subr.bf16.mxu0 0
    %544 = vmatpush1.bf16.msra.mxu0 %v520
    %545 = vmatprep.subr.bf16.mxu0 0
    %546 = vmatpush1.bf16.msra.mxu0 0
    %547 = vmatprep.subr.bf16.mxu0 0
    %548 = vmatpush1.bf16.msra.mxu0 0
    %549 = vmatprep.subr.bf16.mxu0 0
    %550 = vmatpush1.bf16.msra.mxu0 0
    %551 = vmatprep.subr.bf16.mxu0 0
    %552 = vmatpush1.bf16.msra.mxu0 0
    %553 = vmatprep.subr.bf16.mxu0 0
    %554 = vmatpush1.bf16.msra.mxu0 0
    %555 = vmatprep.subr.bf16.mxu0 0
    %556 = vmatpush1.bf16.msra.mxu0 0
    %557 = vmatprep.subr.bf16.mxu0 0
    %558 = vmatpush1.bf16.msra.mxu0 0
    %559 = vmatprep.subr.bf16.mxu0 0
    %560 = vmatpush1.bf16.msra.mxu0 0
    %561 = vmatprep.mubr.bf16.mxu0 0
    %562 = vmatmul.mubr.bf16.gmra.mrb[0].mxu0 %v479
    %v563 = vpop.f32.mrb[0].mxu0
    %v564 = vadd.f32 %v447, %v563
    %v565 = vpop.f32.mrb[0].mxu0
    %v566 = vpop.f32.mrb[0].mxu0
    %v567 = vpop.f32.mrb[0].mxu0
    %568 = vdwg.mxu0
    %569 = vst [vmem:[#allocation10] sm:$0xff] %v564
    // Predicated region
    $region42: #{tpu_custom_call.1} parent=1 // pred_check
      _
    $region43: #{tpu_custom_call.1} parent=1 // pred_check_branch
      %571 = sbr.rel (0) target = $region45
    $region44: #{tpu_custom_call.1} parent=1 // pred_region
      %s573 = ssub.s32 128, 128
      %574 = vsyncadd [#allocation4], %s573
      %s576 = sshll.u32 [#allocation10], 4
      %s577 = int_to_ptr.vmem [resolvable:$true] %s576
      %579 = dma.vmem_to_hbm [thread:$0]  %s577, 128, %s6, [#allocation4]
    $region45: #{tpu_custom_call.1} parent=1 // pred_fallthru
      _
    // Predicated region
    $region46: #{tpu_custom_call.1} parent=1 // pred_check
      _
    $region47: #{tpu_custom_call.1} parent=1 // pred_check_branch
      %581 = sbr.rel (0) target = $region49
    $region48: #{tpu_custom_call.1} parent=1 // pred_region
      %582 = dma.done [#allocation4], 128
    $region49: #{tpu_custom_call.1} parent=1 // pred_fallthru
      _
    %583 = vsyncpa [#allocation3], 1
    %584 = vsyncpa [#allocation6], 1
    %585 = vsyncpa [#allocation9], 1
    %586 = vsyncpa [#allocation4], 1

</llo_original>
